<compile_context>
chip_gen: v6e
topology: v6e:2x2x1
jax: 0.10.0
libtpu: 0.0.40
codegen_flags: <defaults>
</compile_context>

<pallas_src>
import functools
import math

import jax
import jax.numpy as jnp
from jax.experimental import pallas as pl
from jax.experimental.pallas import tpu as pltpu


def _avg_pool_kernel(x_ref, o_ref, acc_ref, *, hw, lane_tile, needs_mask, inv_hw):
    # x_ref:   (row_tile, lane_tile) input tile
    # o_ref:   (row_tile, 1) output tile (written once, at the last k step)
    # acc_ref: (row_tile, 128) float32 lane-dense accumulator scratch
    k = pl.program_id(1)
    last_k = pl.num_programs(1) - 1

    @pl.when(k == 0)
    def _init():
        acc_ref[...] = jnp.zeros_like(acc_ref)

    n_full = lane_tile // 128
    lane_rem = lane_tile % 128

    def accumulate(x):
        if n_full > 0 and lane_rem == 0:
            # Lane-dense path: 128-aligned lane slices are vreg-aligned (no
            # relayout); one VALU add per input vreg, no per-step XLU reduce.
            partial = x[:, 0:128].astype(jnp.float32)
            for j in range(1, n_full):
                partial = partial + x[:, j * 128:(j + 1) * 128].astype(jnp.float32)
            acc_ref[...] += partial
        else:
            # lane_tile == full HW and HW is not a multiple of 128: single k
            # step, plain cross-lane reduce into lane 0 (other lanes stay 0).
            acc_ref[:, 0:1] += jnp.sum(
                x, axis=-1, keepdims=True, dtype=jnp.float32)

    if needs_mask:
        # Only the last lane block is ragged: keep the mask off the hot path.
        @pl.when(k < last_k)
        def _fast():
            accumulate(x_ref[...])

        @pl.when(k == last_k)
        def _ragged():
            x = x_ref[...]
            lane = jax.lax.broadcasted_iota(jnp.int32, x.shape, 1) + k * lane_tile
            accumulate(jnp.where(lane < hw, x, jnp.zeros_like(x)))
    else:
        accumulate(x_ref[...])

    @pl.when(k == last_k)
    def _finalize():
        total = jnp.sum(acc_ref[...], axis=-1, keepdims=True)
        o_ref[...] = (total * inv_hw).astype(o_ref.dtype)


def _round_up(v, m):
    return ((v + m - 1) // m) * m


def _num_tensorcores():
    # Best-effort query of TensorCores per chip (v7x has 2; v5e/v6e have 1).
    # Falls back to 1 (no forced row split -- optimal for single-TC chips).
    try:
        info = pltpu.get_tpu_info()
    except Exception:
        info = None
    for obj in (info, (jax.devices()[0] if jax.devices() else None)):
        if obj is None:
            continue
        for name in ("num_cores", "core_count", "num_tensorcores",
                     "tensorcore_count", "cores_per_chip", "num_cores_per_chip"):
            v = getattr(obj, name, None)
            if isinstance(v, int) and v > 0:
                return v
    return 1


def _pick_lane_tile(hw, max_lane_tile):
    """Choose the lane-axis tile. Returns (lane_tile, needs_mask)."""
    max_lane_tile = max(128, (max_lane_tile // 128) * 128)
    if hw <= max_lane_tile:
        return hw, False
    # Prefer the largest multiple of 128 that divides HW exactly: mask-free.
    best = 0
    for t in range(max_lane_tile, 127, -128):
        if hw % t == 0:
            best = t
            break
    if best >= max_lane_tile // 2:
        return best, False
    return max_lane_tile, (hw % max_lane_tile) != 0


def avg_global_pool2d(x, *, target_block_bytes=8 * 1024 * 1024, max_lane_tile=8192):
    """Pallas equivalent of torch.mean(x, dim=(-2, -1)) for >=3-D input."""
    assert x.ndim >= 3, x.shape
    # TODO(synk): torch.mean raises for integer dtypes; floats only here.
    assert jnp.issubdtype(x.dtype, jnp.floating), x.dtype

    lead = x.shape[:-2]
    H, W = x.shape[-2], x.shape[-1]
    HW = H * W
    R = int(math.prod(lead))

    x2 = x.reshape(R, HW)  # free for contiguous row-major (e.g. NCHW) input

    itemsize = jnp.dtype(x.dtype).itemsize

    lane_tile, needs_mask = _pick_lane_tile(HW, max_lane_tile)

    # Dtype-aware sublane multiple: 8 for f32, 16 for bf16, 32 for 8-bit types.
    sub = max(8, 32 // itemsize)

    # Row-axis tile: fill ~target_block_bytes; multiple of `sub` (or the full R).
    rows_budget = max(1, target_block_bytes // (lane_tile * itemsize))
    if rows_budget >= R:
        row_tile = R
    else:
        row_tile = max(sub, (rows_budget // sub) * sub)

    n_cores = _num_tensorcores()
    if n_cores > 1 and R > sub:
        # Only split rows on multi-TensorCore chips (v7x): keep >= n_cores
        # parallel row blocks so both cores get work. On 1-TC chips the grid is
        # a serial loop and splitting is pure overhead.
        row_tile = min(row_tile, _round_up(pl.cdiv(R, n_cores), sub))
    row_tile = min(row_tile, R)

    grid = (pl.cdiv(R, row_tile), pl.cdiv(HW, lane_tile))

    block_bytes = row_tile * lane_tile * itemsize
    in_spec_kwargs = {}
    if block_bytes <= (1 << 20) and grid[0] * grid[1] >= 3:
        # Small blocks => short DMAs; 3-deep buffering hides issue latency.
        in_spec_kwargs["pipeline_mode"] = pl.Buffered(3)

    kernel = functools.partial(
        _avg_pool_kernel,
        hw=HW,
        lane_tile=lane_tile,
        needs_mask=needs_mask,
        inv_hw=float(1.0 / HW),
    )

    # TODO(synk): for huge R with tiny HW a lane-dense output layout would avoid
    # masked vst.msk writeback; output traffic is negligible for typical shapes.
    out = pl.pallas_call(
        kernel,
        out_shape=jax.ShapeDtypeStruct((R, 1), x.dtype),
        grid_spec=pltpu.PrefetchScalarGridSpec(
            num_scalar_prefetch=0,
            grid=grid,
            in_specs=[
                pl.BlockSpec((row_tile, lane_tile), lambda i, k: (i, k),
                             **in_spec_kwargs)
            ],
            out_specs=pl.BlockSpec((row_tile, 1), lambda i, k: (i, 0)),
            scratch_shapes=[pltpu.VMEM((row_tile, 128), jnp.float32)],
        ),
        compiler_params=pltpu.CompilerParams(
            dimension_semantics=("parallel", "arbitrary"),
            vmem_limit_bytes=32 * 1024 * 1024,
        ),
    )(x2)

    return out.reshape(lead)


if __name__ == "__main__":
    key = jax.random.PRNGKey(0)

    # Small shape consistent with the module: (N, C, H, W) = (2, 4, 16, 16).
    # HW = 256 (multiple of 128): single reduce step, lane-dense accumulator path.
    x = jax.random.normal(key, (2, 4, 16, 16), dtype=jnp.float32)
    y = avg_global_pool2d(x)
    jax.block_until_ready(y)
    y_ref = jnp.mean(x, axis=(-2, -1))
    assert y.shape == (2, 4), y.shape
    assert jnp.allclose(y, y_ref, atol=1e-5, rtol=1e-5)

    # Ragged HW (288, not a multiple of 128), single reduce step: direct-reduce path.
    x2 = jax.random.normal(key, (3, 5, 12, 24), dtype=jnp.float32)
    y2 = avg_global_pool2d(x2)
    jax.block_until_ready(y2)
    y2_ref = jnp.mean(x2, axis=(-2, -1))
    assert y2.shape == (3, 5), y2.shape
    assert jnp.allclose(y2, y2_ref, atol=1e-5, rtol=1e-5)

    # Force multi-step reduction + masked last lane block + Buffered(3) path.
    y2b = avg_global_pool2d(x2, max_lane_tile=128)
    jax.block_until_ready(y2b)
    assert jnp.allclose(y2b, y2_ref, atol=1e-5, rtol=1e-5)

    # Multi-step mask-free path (lane_tile divides HW exactly).
    x3 = jax.random.normal(key, (2, 4, 16, 32), dtype=jnp.float32)
    y3 = avg_global_pool2d(x3, max_lane_tile=256)
    jax.block_until_ready(y3)
    y3_ref = jnp.mean(x3, axis=(-2, -1))
    assert jnp.allclose(y3, y3_ref, atol=1e-5, rtol=1e-5)

    # bf16 input: accumulation stays in float32 inside the kernel.
    x4 = jax.random.normal(key, (2, 8, 16, 16), dtype=jnp.bfloat16)
    y4 = avg_global_pool2d(x4)
    jax.block_until_ready(y4)
    y4_ref = jnp.mean(x4.astype(jnp.float32), axis=(-2, -1))
    assert y4.shape == (2, 8), y4.shape
    assert jnp.allclose(y4.astype(jnp.float32), y4_ref, atol=1e-2, rtol=1e-2)

    print("KERNEL_OK")
</pallas_src>

<mosaic_0001>
module attributes {stable_mosaic.version = 11 : i64} {
  func.func @_avg_pool_kernel(%arg0: i32, %arg1: i32, %arg2: memref<8x256xf32, #tpu.memory_space<vmem>>, %arg3: memref<8x1xf32, #tpu.memory_space<vmem>>, %arg4: memref<8x128xf32, #tpu.memory_space<vmem>>) attributes {dimension_semantics = [#tpu.dimension_semantics<parallel>, #tpu.dimension_semantics<arbitrary>], iteration_bounds = array<i64: 1, 1>, scalar_prefetch = 0 : i64, scratch_operands = 1 : i64, tpu.core_type = #tpu.core_type<tc>, window_params = [{transform_indices = @transform_0, window_bounds = array<i64: 8, 256>}, {transform_indices = @transform_1, window_bounds = array<i64: 8, 1>}]} {
    %c0_i32 = arith.constant 0 : i32
    %0 = arith.cmpi eq, %arg1, %c0_i32 : i32
    %1 = arith.extui %0 : i1 to i32
    %c0_i32_0 = arith.constant 0 : i32
    %2 = arith.cmpi ne, %1, %c0_i32_0 : i32
    scf.if %2 {
      %cst = arith.constant 0.000000e+00 : f32
      %13 = vector.broadcast %cst : f32 to vector<8x128xf32>
      %c0_8 = arith.constant 0 : index
      %c0_9 = arith.constant 0 : index
      %14 = vector.load %arg4[%c0_8, %c0_9] : memref<8x128xf32, #tpu.memory_space<vmem>>, vector<8x128xf32>
      tpu.vector_store %arg4[%c0_8, %c0_9], %13 {strides = array<i32>} : memref<8x128xf32, #tpu.memory_space<vmem>>, vector<8x128xf32>,
    } else {
    }
    %c0 = arith.constant 0 : index
    %c0_1 = arith.constant 0 : index
    %3 = vector.load %arg2[%c0, %c0_1] : memref<8x256xf32, #tpu.memory_space<vmem>>, vector<8x256xf32>
    %4 = vector.extract_strided_slice %3 {offsets = [0, 0], sizes = [8, 128], strides = [1, 1]} : vector<8x256xf32> to vector<8x128xf32>
    %5 = vector.extract_strided_slice %3 {offsets = [0, 128], sizes = [8, 128], strides = [1, 1]} : vector<8x256xf32> to vector<8x128xf32>
    %6 = arith.addf %4, %5 : vector<8x128xf32>
    %c0_2 = arith.constant 0 : index
    %c0_3 = arith.constant 0 : index
    %7 = vector.load %arg4[%c0_2, %c0_3] : memref<8x128xf32, #tpu.memory_space<vmem>>, vector<8x128xf32>
    %8 = arith.addf %7, %6 : vector<8x128xf32>
    %c0_4 = arith.constant 0 : index
    %c0_5 = arith.constant 0 : index
    %9 = vector.load %arg4[%c0_4, %c0_5] : memref<8x128xf32, #tpu.memory_space<vmem>>, vector<8x128xf32>
    tpu.vector_store %arg4[%c0_4, %c0_5], %8 {strides = array<i32>} : memref<8x128xf32, #tpu.memory_space<vmem>>, vector<8x128xf32>,
    %c0_i32_6 = arith.constant 0 : i32
    %10 = arith.cmpi eq, %arg1, %c0_i32_6 : i32
    %11 = arith.extui %10 : i1 to i32
    %c0_i32_7 = arith.constant 0 : i32
    %12 = arith.cmpi ne, %11, %c0_i32_7 : i32
    scf.if %12 {
      %c0_8 = arith.constant 0 : index
      %c0_9 = arith.constant 0 : index
      %13 = vector.load %arg4[%c0_8, %c0_9] : memref<8x128xf32, #tpu.memory_space<vmem>>, vector<8x128xf32>
      %cst = arith.constant dense<0.000000e+00> : vector<8xf32>
      %14 = vector.multi_reduction <add>, %13, %cst [1] : vector<8x128xf32> to vector<8xf32>
      %15 = vector.shape_cast %14 : vector<8xf32> to vector<8x1xf32>
      %cst_10 = arith.constant 3.906250e-03 : f32
      %16 = vector.broadcast %cst_10 : f32 to vector<8x1xf32>
      %17 = arith.mulf %15, %16 : vector<8x1xf32>
      %c0_11 = arith.constant 0 : index
      %c0_12 = arith.constant 0 : index
      %18 = vector.load %arg3[%c0_11, %c0_12] : memref<8x1xf32, #tpu.memory_space<vmem>>, vector<8x1xf32>
      tpu.vector_store %arg3[%c0_11, %c0_12], %17 {strides = array<i32>} : memref<8x1xf32, #tpu.memory_space<vmem>>, vector<8x1xf32>,
    } else {
    }
    return
  }
  func.func @transform_0(%arg0: i32, %arg1: i32) -> (i32, i32) {
    %c0_i32 = arith.constant 0 : i32
    return %arg0, %arg1 : i32, i32
  }
  func.func @transform_1(%arg0: i32, %arg1: i32) -> (i32, i32) {
    %c0_i32 = arith.constant 0 : i32
    %c0_i32_0 = arith.constant 0 : i32
    return %arg0, %c0_i32 : i32, i32
  }
}

</mosaic_0001>

<llo_original>
// kernel: tpu_custom_call.1
$region0: #{tpu_custom_call.1}
  #allocation0 [shape = 'u32[]', space=smem, size = 0x4, offset = 0x4, fixed_abs, tag = 'smem constant byte address 0x4 - core index']
  #allocation1 [shape = 'u32[144,128]{1,0:T(1,128)}', space=vmem, size = 0x12000, scoped, tag = 'internal scratch']
  #allocation2 [shape = 'f32[8,128]{1,0:T(8,128)}', space=vmem, size = 0x1000, scoped, tag = 'scratch operand']
  %s0 = inlined_call_operand.hbm [shape: f32[8,256], index: 0, kind: input, shape index: {}]
  %s1 = inlined_call_operand.vmem [shape: f32[8,1], index: 1, kind: output, shape index: {}]
  %s2 = sld [smem:[#allocation0]]
  $region26: #{tpu_custom_call.1} parent=0
    _
  %s4 = ssub.s32 1, %s2
  %s5 = scalar_select 0, %s4, %s2
  $region1: #{tpu_custom_call.1} parent=0
    #allocation3 [shape = 'u8[8192]{0}', space=vmem, size = 0x2000, scoped, tag = 'input window, operand 0, single buffered']
    #allocation4 [shape = 's32[1]{0}', space=sflag, size = 0x4, scoped, tag = 'scoped memory for tpu_custom_call.1']
    %6 = vsyncpa [#allocation4], 0
    // Predicated region
    $region2: #{tpu_custom_call.1} parent=1 // pred_check
      _
    $region3: #{tpu_custom_call.1} parent=1 // pred_check_branch
      %8 = sbr.rel (0) target = $region5
    $region4: #{tpu_custom_call.1} parent=1 // pred_region
      %s10 = ssub.s32 256, 256
      %11 = vsyncadd [#allocation4], %s10
      %s13 = sshll.u32 [#allocation3], 4
      %s14 = int_to_ptr.vmem [resolvable:$true] %s13
      %16 = dma.hbm_to_vmem [thread:$0]  %s0, 256, %s14, [#allocation4]
    $region5: #{tpu_custom_call.1} parent=1 // pred_fallthru
      _
    // Predicated region
    $region6: #{tpu_custom_call.1} parent=1 // pred_check
      _
    $region7: #{tpu_custom_call.1} parent=1 // pred_check_branch
      %18 = sbr.rel (0) target = $region9
    $region8: #{tpu_custom_call.1} parent=1 // pred_region
      %19 = dma.done [#allocation4], 256
    $region9: #{tpu_custom_call.1} parent=1 // pred_fallthru
      _
    %p20 = scmp.eq.s32.totalorder 0, 0
    // Predicated region
    $region10: #{tpu_custom_call.1} parent=1 // pred_check
      %p21 = pneg %p20
    $region11: #{tpu_custom_call.1} parent=1 // pred_check_branch
      %23 = sbr.rel (%p21) target = $region13
    $region12: #{tpu_custom_call.1} parent=1 // pred_region
      %24 = vst [vmem:[#allocation2] sm:$0xff] 0.0
    $region13: #{tpu_custom_call.1} parent=1 // pred_fallthru
      _
    %v25 = vld [vmem:[#allocation3] sm:$0xff]
    %v26 = vld [vmem:[#allocation3 + $0x8] sm:$0xff]
    %v27 = vadd.f32 %v25, %v26
    %v28 = vld [vmem:[#allocation2] sm:$0xff]
    %v29 = vadd.f32 %v28, %v27
    %30 = vst [vmem:[#allocation2] sm:$0xff] %v29
    // Predicated region
    $region14: #{tpu_custom_call.1} parent=1 // pred_check
      %p31 = pneg %p20
    $region15: #{tpu_custom_call.1} parent=1 // pred_check_branch
      %33 = sbr.rel (%p31) target = $region17
    $region16: #{tpu_custom_call.1} parent=1 // pred_region
      %v34 = vld [vmem:[#allocation2] sm:$0xff]
      %35 = vadd.xlane.f32.xlu0 %v34
      %v36 = vpop.xlane.xlu0 %35
      %v37 = vmul.f32 %v36, 0.00390625
      %vm38 = vcmask 7168
      %39 = vst.msk [vmem:[%s1] sm:$0xff] %vm38, %v37
    $region17: #{tpu_custom_call.1} parent=1 // pred_fallthru
      _
    // Predicated region
    $region18: #{tpu_custom_call.1} parent=1 // pred_check
      _
    $region19: #{tpu_custom_call.1} parent=1 // pred_check_branch
      %41 = sbr.rel (0) target = $region21
    $region20: #{tpu_custom_call.1} parent=1 // pred_region
      _
    $region21: #{tpu_custom_call.1} parent=1 // pred_fallthru
      _
    // Predicated region
    $region22: #{tpu_custom_call.1} parent=1 // pred_check
      _
    $region23: #{tpu_custom_call.1} parent=1 // pred_check_branch
      %43 = sbr.rel (0) target = $region25
    $region24: #{tpu_custom_call.1} parent=1 // pred_region
      _
    $region25: #{tpu_custom_call.1} parent=1 // pred_fallthru
      _
    %44 = vsyncpa [#allocation4], 1

</llo_original>
